<compile_context>
chip_gen: v5e
topology: v5e:2x2
jax: 0.10.0
libtpu: 0.0.40
codegen_flags: <defaults>
</compile_context>

<pallas_src>
import jax
import jax.numpy as jnp
from jax.experimental import pallas as pl
from jax.experimental.pallas import tpu as pltpu


# ----------------------------------------------------------------------------
# Tiling helpers
# ----------------------------------------------------------------------------
def _round_up(a, b):
    return (a + b - 1) // b * b


def _max_block_bytes():
    """Per-generation block cap: <= physical-VMEM/16 so 2x(in)+2x(out)
    double-buffered blocks stay at <= 1/4 of capacity with headroom.
      v5e/v6e (128 MiB VMEM) -> 8 MiB blocks;  v7x (64 MiB) -> 4 MiB blocks."""
    try:
        vmem = pltpu.get_tpu_info().vmem_capacity_bytes
    except Exception:
        vmem = 64 << 20          # conservative default (v7x-sized)
    return int(min(8 << 20, max(2 << 20, vmem // 16)))


def _pick_hw_tile(C, HW, itemsize, max_block_bytes):
    """Lane-tile size: multiple of 128, one (C, T) block <= max_block_bytes.
    No wrapper padding is done: a partial last block is masked by Pallas, so
    padded HBM traffic is never generated regardless of divisibility."""
    hw128 = _round_up(HW, 128)
    t = max_block_bytes // max(1, C * itemsize)
    t = min(t, hw128)
    t = max(128, (t // 128) * 128)
    return t


# ----------------------------------------------------------------------------
# Kernel 1: default path (mode='largest'):  y = x * scale + shift
#   scale/shift (per channel) are folded in the wrapper from
#   (running_mean, running_var, weight, bias, eps).
# ----------------------------------------------------------------------------
def _affine_kernel(x_ref, scale_ref, shift_ref, o_ref):
    # x_ref/o_ref: (C, T_HW); scale/shift: (C, 1) broadcast along lanes.
    y = x_ref[...] * scale_ref[...] + shift_ref[...]
    o_ref[...] = y.astype(o_ref.dtype)


def ds_batchnorm2d_largest(x, running_mean, running_var, weight, bias,
                           eps=1e-5, max_block_bytes=None):
    """Eval-mode F.batch_norm over NCHW input (mode='largest' branch)."""
    N, C, H, W = x.shape
    HW = H * W
    if max_block_bytes is None:
        max_block_bytes = _max_block_bytes()
    T = _pick_hw_tile(C, HW, x.dtype.itemsize, max_block_bytes)
    # HW-tile axis leads so v7x's two TensorCores split spatial tiles, not N.
    grid = (pl.cdiv(HW, T), N)

    # Fold BN stats + affine into one per-channel scale/shift (O(C) prep).
    inv = jax.lax.rsqrt(running_var.astype(jnp.float32) + eps)
    scale = weight.astype(jnp.float32) * inv
    shift = bias.astype(jnp.float32) - running_mean.astype(jnp.float32) * scale

    xo_spec = pl.BlockSpec((pl.Squeezed(), C, T), lambda h, n: (n, 0, h))
    par_spec = pl.BlockSpec((C, 1), lambda h, n: (0, 0))

    block_bytes = C * T * x.dtype.itemsize
    out = pl.pallas_call(
        _affine_kernel,
        out_shape=jax.ShapeDtypeStruct((N, C, HW), x.dtype),
        grid=grid,
        in_specs=[xo_spec, par_spec, par_spec],
        out_specs=xo_spec,
        compiler_params=pltpu.CompilerParams(
            dimension_semantics=("parallel", "parallel"),
            vmem_limit_bytes=4 * block_bytes + (8 << 20)),
    )(x.reshape(N, C, HW), scale.reshape(C, 1), shift.reshape(C, 1))
    return out.reshape(N, C, H, W)


# ----------------------------------------------------------------------------
# Kernel 2: dynamic path (gate-mixed stats + differentiable channel gate)
#   Per-(n, c) scale/shift/gsum are precomputed in the wrapper; the kernel
#   does FMA -> NaN-clean -> gate multiply (reference ordering).
# ----------------------------------------------------------------------------
def _gated_affine_kernel(x_ref, scale_ref, shift_ref, gsum_ref, o_ref):
    # x_ref/o_ref: (C, T_HW); scale/shift/gsum: (C, 1) for this batch element.
    xn = x_ref[...] * scale_ref[...] + shift_ref[...]
    xn = jnp.where(jnp.isnan(xn), jnp.zeros_like(xn), xn)   # clean, then gate
    o_ref[...] = (xn * gsum_ref[...]).astype(o_ref.dtype)


def ds_batchnorm2d_dynamic(x, gate, mean_stack, var_stack, weight, bias,
                           channel_list, eps=1e-5, max_block_bytes=None):
    """mode='dynamic' path: gate is (N, K) soft channel-width choice."""
    N, C, H, W = x.shape
    HW = H * W
    if max_block_bytes is None:
        max_block_bytes = _max_block_bytes()
    T = _pick_hw_tile(C, HW, x.dtype.itemsize, max_block_bytes)
    grid = (pl.cdiv(HW, T), N)

    # Wrapper-side O(N*C) prep: gate-mixed running stats, per-channel affine,
    # and the effective per-(n, c) gate (gsum[n, c] = sum_k gate[n,k]*[c < cl_k]).
    g = gate.astype(jnp.float32)
    mean_mix = g @ mean_stack.astype(jnp.float32)          # (N, C)
    var_mix = g @ var_stack.astype(jnp.float32)            # (N, C)
    mask = (jnp.arange(C)[None, :] < jnp.asarray(channel_list)[:, None]
            ).astype(jnp.float32)                          # (K, C)
    gsum = g @ mask                                        # (N, C)
    inv = jax.lax.rsqrt(var_mix + eps)
    scale = weight.astype(jnp.float32)[None, :] * inv      # (N, C)
    shift = bias.astype(jnp.float32)[None, :] - mean_mix * scale

    xo_spec = pl.BlockSpec((pl.Squeezed(), C, T), lambda h, n: (n, 0, h))
    nc_spec = pl.BlockSpec((pl.Squeezed(), C, 1), lambda h, n: (n, 0, 0))

    block_bytes = C * T * x.dtype.itemsize
    out = pl.pallas_call(
        _gated_affine_kernel,
        out_shape=jax.ShapeDtypeStruct((N, C, HW), x.dtype),
        grid=grid,
        in_specs=[xo_spec, nc_spec, nc_spec, nc_spec],
        out_specs=xo_spec,
        compiler_params=pltpu.CompilerParams(
            dimension_semantics=("parallel", "parallel"),
            vmem_limit_bytes=4 * block_bytes + (8 << 20)),
    )(x.reshape(N, C, HW),
      scale.reshape(N, C, 1), shift.reshape(N, C, 1), gsum.reshape(N, C, 1))
    return out.reshape(N, C, H, W)


# ----------------------------------------------------------------------------
# Pure-JAX references (mirror the PyTorch semantics)
# ----------------------------------------------------------------------------
def _ref_largest(x, mean, var, w, b, eps):
    return ((x - mean[None, :, None, None])
            / jnp.sqrt(var[None, :, None, None] + eps)
            * w[None, :, None, None] + b[None, :, None, None])


def _ref_dynamic(x, gate, mean_stack, var_stack, w, b, channel_list, eps):
    mean = gate @ mean_stack          # (N, C)
    var = gate @ var_stack            # (N, C)
    xn = (x - mean[:, :, None, None]) / jnp.sqrt(var[:, :, None, None] + eps)
    xn = xn * w[None, :, None, None] + b[None, :, None, None]
    xn = jnp.where(jnp.isnan(xn), jnp.zeros_like(xn), xn)
    ret = jnp.zeros_like(xn)
    for idx, cl in enumerate(channel_list):
        ret = ret.at[:, :cl].add(xn[:, :cl] * gate[:, idx][:, None, None, None])
    return ret


if __name__ == "__main__":
    key = jax.random.PRNGKey(0)
    k1, k2, k3, k4, k5, k6, k7 = jax.random.split(key, 7)

    num_features_list = [2, 3, 4]   # out_channels_list
    K = len(num_features_list)
    C = num_features_list[-1]
    N, H, W = 2, 16, 16
    eps = 1e-5

    x = jax.random.normal(k1, (N, C, H, W), jnp.float32)

    # Deterministic synthetic "running stats" of each aux BatchNorm2d, padded
    # to C channels with zeros (as the PyTorch dynamic branch builds them).
    mean_stack = jnp.zeros((K, C), jnp.float32)
    var_stack = jnp.zeros((K, C), jnp.float32)
    for i, cl in enumerate(num_features_list):
        mean_stack = mean_stack.at[i, :cl].set(
            0.1 * jax.random.normal(jax.random.fold_in(k2, i), (cl,), jnp.float32))
        var_stack = var_stack.at[i, :cl].set(
            jax.random.uniform(jax.random.fold_in(k3, i), (cl,), jnp.float32,
                               minval=0.5, maxval=1.5))
    weight = 1.0 + 0.1 * jax.random.normal(k4, (C,), jnp.float32)  # aux_bn[-1].weight
    bias = 0.1 * jax.random.normal(k5, (C,), jnp.float32)          # aux_bn[-1].bias

    # Small block cap to force multiple HW tiles (T=128) in the tests below.
    small_blk = C * 128 * 4

    # --- path 1: mode='largest' (default), full-width input, eval-mode BN ---
    out1 = jax.block_until_ready(
        ds_batchnorm2d_largest(x, mean_stack[-1], var_stack[-1], weight, bias,
                               eps, max_block_bytes=small_blk))
    ref1 = _ref_largest(x, mean_stack[-1], var_stack[-1], weight, bias, eps)
    assert out1.shape == x.shape and out1.dtype == x.dtype
    assert jnp.allclose(out1, ref1, atol=1e-4, rtol=1e-4), "largest path mismatch"

    # --- path 1b: default (per-generation) block size, single tile ---
    out1a = jax.block_until_ready(
        ds_batchnorm2d_largest(x, mean_stack[-1], var_stack[-1], weight, bias, eps))
    assert jnp.allclose(out1a, ref1, atol=1e-4, rtol=1e-4), "default-block mismatch"

    # --- path 1c: HW not a multiple of 128 (exercises masked partial block) ---
    x_odd = jax.random.normal(k7, (N, C, 14, 14), jnp.float32)
    out1b = jax.block_until_ready(
        ds_batchnorm2d_largest(x_odd, mean_stack[-1], var_stack[-1], weight, bias,
                               eps, max_block_bytes=small_blk))
    ref1b = _ref_largest(x_odd, mean_stack[-1], var_stack[-1], weight, bias, eps)
    assert out1b.shape == x_odd.shape
    assert jnp.allclose(out1b, ref1b, atol=1e-4, rtol=1e-4), "partial-block mismatch"

    # --- path 2: mode='dynamic', channel_choice = soft gate over widths ---
    gate = jax.nn.softmax(jax.random.normal(k6, (N, K), jnp.float32), axis=-1)
    out2 = jax.block_until_ready(
        ds_batchnorm2d_dynamic(x, gate, mean_stack, var_stack, weight, bias,
                               num_features_list, eps, max_block_bytes=small_blk))
    ref2 = _ref_dynamic(x, gate, mean_stack, var_stack, weight, bias,
                        num_features_list, eps)
    assert out2.shape == x.shape and out2.dtype == x.dtype
    assert jnp.allclose(out2, ref2, atol=1e-4, rtol=1e-4), "dynamic path mismatch"

    print("KERNEL_OK")
</pallas_src>

<mosaic_0001>
module attributes {stable_mosaic.version = 11 : i64} {
  func.func @_affine_kernel(%arg0: i32, %arg1: i32, %arg2: memref<1x4x128xf32, #tpu.memory_space<vmem>>, %arg3: memref<4x1xf32, #tpu.memory_space<vmem>>, %arg4: memref<4x1xf32, #tpu.memory_space<vmem>>, %arg5: memref<1x4x128xf32, #tpu.memory_space<vmem>>) attributes {dimension_semantics = [#tpu.dimension_semantics<parallel>, #tpu.dimension_semantics<parallel>], iteration_bounds = array<i64: 2, 2>, scalar_prefetch = 0 : i64, scratch_operands = 0 : i64, tpu.core_type = #tpu.core_type<tc>, window_params = [{transform_indices = @transform_0, window_bounds = array<i64: 1, 4, 128>}, {pipeline_mode = #tpu.pipeline_mode<synchronous>, transform_indices = @transform_1, window_bounds = array<i64: 4, 1>}, {pipeline_mode = #tpu.pipeline_mode<synchronous>, transform_indices = @transform_2, window_bounds = array<i64: 4, 1>}, {transform_indices = @transform_3, window_bounds = array<i64: 1, 4, 128>}]} {
    %c0 = arith.constant 0 : index
    %c0_0 = arith.constant 0 : index
    %c0_1 = arith.constant 0 : index
    %0 = vector.load %arg2[%c0, %c0_0, %c0_1] : memref<1x4x128xf32, #tpu.memory_space<vmem>>, vector<1x4x128xf32>
    %1 = vector.shape_cast %0 : vector<1x4x128xf32> to vector<4x128xf32>
    %c0_2 = arith.constant 0 : index
    %c0_3 = arith.constant 0 : index
    %2 = vector.load %arg3[%c0_2, %c0_3] : memref<4x1xf32, #tpu.memory_space<vmem>>, vector<4x1xf32>
    %3 = vector.broadcast %2 : vector<4x1xf32> to vector<4x128xf32>
    %4 = arith.mulf %1, %3 : vector<4x128xf32>
    %c0_4 = arith.constant 0 : index
    %c0_5 = arith.constant 0 : index
    %5 = vector.load %arg4[%c0_4, %c0_5] : memref<4x1xf32, #tpu.memory_space<vmem>>, vector<4x1xf32>
    %6 = vector.broadcast %5 : vector<4x1xf32> to vector<4x128xf32>
    %7 = arith.addf %4, %6 : vector<4x128xf32>
    %c0_6 = arith.constant 0 : index
    %c0_7 = arith.constant 0 : index
    %c0_8 = arith.constant 0 : index
    %8 = vector.load %arg5[%c0_6, %c0_7, %c0_8] : memref<1x4x128xf32, #tpu.memory_space<vmem>>, vector<1x4x128xf32>
    %9 = vector.shape_cast %8 : vector<1x4x128xf32> to vector<4x128xf32>
    %10 = vector.shape_cast %7 : vector<4x128xf32> to vector<1x4x128xf32>
    tpu.vector_store %arg5[%c0_6, %c0_7, %c0_8], %10 {strides = array<i32>} : memref<1x4x128xf32, #tpu.memory_space<vmem>>, vector<1x4x128xf32>,
    return
  }
  func.func @transform_0(%arg0: i32, %arg1: i32) -> (i32, i32, i32) {
    %c0_i32 = arith.constant 0 : i32
    %c0_i32_0 = arith.constant 0 : i32
    return %arg1, %c0_i32, %arg0 : i32, i32, i32
  }
  func.func @transform_1(%arg0: i32, %arg1: i32) -> (i32, i32) {
    %c0_i32 = arith.constant 0 : i32
    %c0_i32_0 = arith.constant 0 : i32
    %c0_i32_1 = arith.constant 0 : i32
    return %c0_i32, %c0_i32_0 : i32, i32
  }
  func.func @transform_2(%arg0: i32, %arg1: i32) -> (i32, i32) {
    %c0_i32 = arith.constant 0 : i32
    %c0_i32_0 = arith.constant 0 : i32
    %c0_i32_1 = arith.constant 0 : i32
    return %c0_i32, %c0_i32_0 : i32, i32
  }
  func.func @transform_3(%arg0: i32, %arg1: i32) -> (i32, i32, i32) {
    %c0_i32 = arith.constant 0 : i32
    %c0_i32_0 = arith.constant 0 : i32
    return %arg1, %c0_i32, %arg0 : i32, i32, i32
  }
}

</mosaic_0001>

<llo_original>
// kernel: tpu_custom_call.1
$region0: #{tpu_custom_call.1}
  #allocation0 [shape = 'u32[]', space=smem, size = 0x4, offset = 0x4, fixed_abs, tag = 'smem constant byte address 0x4 - core index']
  #allocation1 [shape = 'u32[72,128]{1,0:T(1,128)}', space=vmem, size = 0x9000, scoped, tag = 'internal scratch']
  %s0 = inlined_call_operand.hbm [shape: f32[2,4,256], index: 0, kind: input, shape index: {}]
  %s1 = inlined_call_operand.vmem [shape: f32[4,1], index: 1, kind: input, shape index: {}]
  %s2 = inlined_call_operand.vmem [shape: f32[4,1], index: 2, kind: input, shape index: {}]
  %s3 = inlined_call_operand.hbm [shape: f32[2,4,256], index: 3, kind: output, shape index: {}]
  %s4 = sld [smem:[#allocation0]]
  $region49: #{tpu_custom_call.1} parent=0
    _
  %s6 = ssub.s32 1, %s4
  %s7 = scalar_select 0, %s6, %s4
  $region1: #{tpu_custom_call.1} parent=0
    #allocation2 [shape = 'u8[4096]{0}', space=vmem, size = 0x1000, scoped, tag = 'input window, operand 0']
    #allocation3 [shape = 's32[2]{0}', space=sflag, size = 0x8, scoped, tag = 'scoped memory for tpu_custom_call.1']
    #allocation4 [shape = 's32[2]{0}', space=sflag, size = 0x8, scoped, tag = 'scoped memory for tpu_custom_call.1']
    #allocation5 [shape = 'u8[4096]{0}', space=vmem, size = 0x1000, scoped, tag = 'output window, operand 0']
    %8 = vsyncpa [#allocation3], 0
    %s9 = scalar_lea.sflag [#allocation3], 1
    %10 = vsyncpa %s9, 0
    %11 = vsyncpa [#allocation4], 0
    %s12 = scalar_lea.sflag [#allocation4], 1
    %13 = vsyncpa %s12, 0
    loop: start=0, step=1, limit=6
    $region2: #{tpu_custom_call.1} parent=1 // loop_pre_header
      _
    $region3: #{tpu_custom_call.1} parent=1 // loop_header
      %s15 = sphi 0, %s19
      %p16 = scmp.ge.s32.totalorder %s15, 6
      %s22 = sphi 0, %s34
      %s23 = sphi 0, %s30
      %s24 = sphi 0, %s22
      %s25 = sphi 0, %s23
      %s26 = sphi 0, %s24
      %s27 = sphi 0, %s25
      %s39 = sphi 0, %s41
      %s42 = sphi 0, %s39
      %s43 = sphi 0, %s42
      %s59 = sphi 0, %s43
      %s63 = sphi 0, %s63
      %s65 = sphi 0, %s63
      %s66 = sphi 0, %s65
      %s80 = sphi 0, %s66
      %s84 = sphi 0, %s84
      %s86 = sphi 0, %s84
      %s87 = sphi 0, %s86
      %s101 = sphi 0, %s87
      %s109 = sphi 0, %s111
      %s112 = sphi 0, %s109
      %s113 = sphi 0, %s112
      %s129 = sphi 0, %s113
    $region4: #{tpu_custom_call.1} parent=1 // loop_header_branch
      %18 = sbr.rel (%p16) target = $region8
    $region5: #{tpu_custom_call.1} parent=1 // loop_body
      %s20 = ssub.s32 %s15, 1
      %s21 = ssub.s32 %s15, 2
      %s28 = sadd.s32 1, %s23
      %p29 = scmp.ge.s32.totalorder %s28, 2
      %s30 = scalar_select %p29, 0, %s28
      %s31 = sadd.s32 1, %s22
      %s32 = scalar_select %p29, %s31, %s22
      %p33 = scmp.ge.s32.totalorder %s32, 2
      %s34 = scalar_select %p33, 0, %s32
      %s35 = ssub.s32 %s23, %s30
      %s36 = ssub.s32 %s22, %s34
      %s37 = sor.u32 %s35, %s36
      %p38 = scmp.eq.s32.totalorder %s37, 0
      %s40 = sadd.s32 %s39, 1
      %s41 = scalar_select %p38, %s39, %s40
      %p44 = pneg %p38
      %p45 = scmp.eq.s32.totalorder %s15, 3
      %p46 = por %p44, %p45
      %p47 = scmp.ne.s32.totalorder %s39, %s42
      %p48 = scmp.eq.s32.totalorder %s15, 0
      %p49 = por %p47, %p48
      %p50 = scmp.ne.s32.totalorder %s39, %s42
      %p51 = scmp.eq.s32.totalorder %s20, 3
      %p52 = por %p50, %p51
      %p53 = scmp.ne.s32.totalorder %s42, %s43
      %p54 = scmp.eq.s32.totalorder %s20, 0
      %p55 = por %p53, %p54
      %p56 = scmp.ne.s32.totalorder %s42, %s43
      %p57 = scmp.eq.s32.totalorder %s21, 3
      %p58 = por %p56, %p57
      %p60 = scmp.ne.s32.totalorder %s43, %s59
      %p61 = scmp.eq.s32.totalorder %s21, 0
      %p62 = por %p60, %p61
      %s64 = sadd.s32 %s63, 1
      %p67 = scmp.eq.s32.totalorder %s15, 3
      %p68 = scmp.ne.s32.totalorder %s63, %s65
      %p69 = scmp.eq.s32.totalorder %s15, 0
      %p70 = por %p68, %p69
      %p71 = scmp.ne.s32.totalorder %s63, %s65
      %p72 = scmp.eq.s32.totalorder %s20, 3
      %p73 = por %p71, %p72
      %p74 = scmp.ne.s32.totalorder %s65, %s66
      %p75 = scmp.eq.s32.totalorder %s20, 0
      %p76 = por %p74, %p75
      %p77 = scmp.ne.s32.totalorder %s65, %s66
      %p78 = scmp.eq.s32.totalorder %s21, 3
      %p79 = por %p77, %p78
      %p81 = scmp.ne.s32.totalorder %s66, %s80
      %p82 = scmp.eq.s32.totalorder %s21, 0
      %p83 = por %p81, %p82
      %s85 = sadd.s32 %s84, 1
      %p88 = scmp.eq.s32.totalorder %s15, 3
      %p89 = scmp.ne.s32.totalorder %s84, %s86
      %p90 = scmp.eq.s32.totalorder %s15, 0
      %p91 = por %p89, %p90
      %p92 = scmp.ne.s32.totalorder %s84, %s86
      %p93 = scmp.eq.s32.totalorder %s20, 3
      %p94 = por %p92, %p93
      %p95 = scmp.ne.s32.totalorder %s86, %s87
      %p96 = scmp.eq.s32.totalorder %s20, 0
      %p97 = por %p95, %p96
      %p98 = scmp.ne.s32.totalorder %s86, %s87
      %p99 = scmp.eq.s32.totalorder %s21, 3
      %p100 = por %p98, %p99
      %p102 = scmp.ne.s32.totalorder %s87, %s101
      %p103 = scmp.eq.s32.totalorder %s21, 0
      %p104 = por %p102, %p103
      %s105 = ssub.s32 %s23, %s30
      %s106 = ssub.s32 %s22, %s34
      %s107 = sor.u32 %s105, %s106
      %p108 = scmp.eq.s32.totalorder %s107, 0
      %s110 = sadd.s32 %s109, 1
      %s111 = scalar_select %p108, %s109, %s110
      %p114 = pneg %p108
      %p115 = scmp.eq.s32.totalorder %s15, 3
      %p116 = por %p114, %p115
      %p117 = scmp.ne.s32.totalorder %s109, %s112
      %p118 = scmp.eq.s32.totalorder %s15, 0
      %p119 = por %p117, %p118
      %p120 = scmp.ne.s32.totalorder %s109, %s112
      %p121 = scmp.eq.s32.totalorder %s20, 3
      %p122 = por %p120, %p121
      %p123 = scmp.ne.s32.totalorder %s112, %s113
      %p124 = scmp.eq.s32.totalorder %s20, 0
      %p125 = por %p123, %p124
      %p126 = scmp.ne.s32.totalorder %s112, %s113
      %p127 = scmp.eq.s32.totalorder %s21, 3
      %p128 = por %p126, %p127
      %p130 = scmp.ne.s32.totalorder %s113, %s129
      %p131 = scmp.eq.s32.totalorder %s21, 0
      %p132 = por %p130, %p131
      %p133 = scmp.le.s32.totalorder 1, %s15
      %p134 = scmp.lt.s32.totalorder %s15, 5
      %p135 = pnand %p133, %p134
      %p136 = pneg %p135
      // Predicated region
      $region9: #{tpu_custom_call.1} parent=5 // pred_check
        _
      $region10: #{tpu_custom_call.1} parent=5 // pred_check_branch
        %138 = sbr.rel (%p135) target = $region12
      $region11: #{tpu_custom_call.1} parent=5 // pred_region
        %s139 = ssub.s32 %s15, 1
        // Predicated region
        $region13: #{tpu_custom_call.1} parent=11 // pred_check
          %p140 = pneg %p76
        $region14: #{tpu_custom_call.1} parent=11 // pred_check_branch
          %142 = sbr.rel (%p140) target = $region16
        $region15: #{tpu_custom_call.1} parent=11 // pred_region
          _
        $region16: #{tpu_custom_call.1} parent=11 // pred_fallthru
          _
        // Predicated region
        $region17: #{tpu_custom_call.1} parent=11 // pred_check
          %p143 = pneg %p97
        $region18: #{tpu_custom_call.1} parent=11 // pred_check_branch
          %145 = sbr.rel (%p143) target = $region20
        $region19: #{tpu_custom_call.1} parent=11 // pred_region
          _
        $region20: #{tpu_custom_call.1} parent=11 // pred_fallthru
          _
      $region12: #{tpu_custom_call.1} parent=5 // pred_fallthru
        _
      %p146 = scmp.lt.s32.totalorder %s15, 4
      // Predicated region
      $region21: #{tpu_custom_call.1} parent=5 // pred_check
        %p147 = pneg %p146
      $region22: #{tpu_custom_call.1} parent=5 // pred_check_branch
        %149 = sbr.rel (%p147) target = $region24
      $region23: #{tpu_custom_call.1} parent=5 // pred_region
        // Predicated region
        $region25: #{tpu_custom_call.1} parent=23 // pred_check
          %p150 = pneg %p49
        $region26: #{tpu_custom_call.1} parent=23 // pred_check_branch
          %152 = sbr.rel (%p150) target = $region28
        $region27: #{tpu_custom_call.1} parent=23 // pred_region
          %s153 = sand.u32 %s39, 1
          %s154 = scalar_lea.sflag [#allocation3], %s153
          %s155 = sand.u32 %s39, 1
          %s156 = smul.addr %s155, 4
          %s157 = scalar_lea.vmem [#allocation2], %s156
          %159 = vsyncadd %s154, 0
          %s160 = smul.addr %s23, 2
          %s161 = sadd.s32 %s22, %s160
          %s162 = smul.addr %s161, 4
          %s163 = scalar_lea.hbm %s0, %s162
          %s165 = sshll.u32 %s163, 4
          %s166 = int_to_ptr.hbm [resolvable:$true] %s165
          %s167 = sshll.u32 %s157, 4
          %s168 = int_to_ptr.vmem [resolvable:$true] %s167
          %170 = dma.hbm_to_vmem [thread:$0]  %s166, 64, %s168, %s154
        $region28: #{tpu_custom_call.1} parent=23 // pred_fallthru
          _
      $region24: #{tpu_custom_call.1} parent=5 // pred_fallthru
        _
      %p171 = scmp.le.s32.totalorder 1, %s15
      %p172 = scmp.lt.s32.totalorder %s15, 5
      %p173 = pnand %p171, %p172
      %p174 = pneg %p173
      // Predicated region
      $region29: #{tpu_custom_call.1} parent=5 // pred_check
        _
      $region30: #{tpu_custom_call.1} parent=5 // pred_check_branch
        %176 = sbr.rel (%p173) target = $region32
      $region31: #{tpu_custom_call.1} parent=5 // pred_region
        %s177 = ssub.s32 %s15, 1
        %s178 = sand.u32 %s42, 1
        %s179 = scalar_lea.sflag [#allocation3], %s178
        %s180 = sand.u32 %s42, 1
        %s181 = smul.addr %s180, 4
        %s182 = scalar_lea.vmem [#allocation2], %s181
        // Predicated region
        $region33: #{tpu_custom_call.1} parent=31 // pred_check
          %p183 = pneg %p55
        $region34: #{tpu_custom_call.1} parent=31 // pred_check_branch
          %185 = sbr.rel (%p183) target = $region36
        $region35: #{tpu_custom_call.1} parent=31 // pred_region
          %187 = dma.done %s179, 64
        $region36: #{tpu_custom_call.1} parent=31 // pred_fallthru
          _
        %s188 = sand.u32 %s42, 1
        %s189 = scalar_lea.sflag [#allocation3], %s188
        %s190 = sand.u32 %s42, 1
        %s191 = smul.addr %s190, 4
        %s192 = scalar_lea.vmem [#allocation2], %s191
        %p193 = pneg %p55
        %p194 = pneg %p52
        %p195 = pneg %p76
        %p196 = pneg %p73
        %p197 = pneg %p97
        %p198 = pneg %p94
        %p199 = pneg %p125
        %p200 = pneg %p122
        %s201 = sand.u32 %s112, 1
        %s202 = scalar_lea.sflag [#allocation4], %s201
        %s203 = sand.u32 %s112, 1
        %s204 = smul.addr %s203, 4
        %s205 = scalar_lea.vmem [#allocation5], %s204
        %v206 = vld [vmem:[%s182] sm:$0xf]
        %v207 = vld [vmem:[%s1] sm:$0xf]
        %209 = vset.pattern.permute.xlu0 0
        %210 = vperm.xlu0 %209, %v207
        %v211 = vpop.permute.xlu0 %210
        %v213 = vmul.f32 %v206, %v211
        %v214 = vld [vmem:[%s2] sm:$0xf]
        %216 = vset.pattern.permute.xlu0 0
        %217 = vperm.xlu0 %216, %v214
        %v218 = vpop.permute.xlu0 %217
        %v220 = vadd.f32 %v213, %v218
        %221 = vst [vmem:[%s205] sm:$0xf] %v220
        %s222 = sand.u32 %s112, 1
        %s223 = scalar_lea.sflag [#allocation4], %s222
        %s224 = sand.u32 %s112, 1
        %s225 = smul.addr %s224, 4
        %s226 = scalar_lea.vmem [#allocation5], %s225
        // Predicated region
        $region37: #{tpu_custom_call.1} parent=31 // pred_check
          %p227 = pneg %p122
        $region38: #{tpu_custom_call.1} parent=31 // pred_check_branch
          %229 = sbr.rel (%p227) target = $region40
        $region39: #{tpu_custom_call.1} parent=31 // pred_region
          %231 = vsyncadd %s223, 0
          %s232 = smul.addr %s25, 2
          %s233 = sadd.s32 %s24, %s232
          %s234 = smul.addr %s233, 4
          %s235 = scalar_lea.hbm %s3, %s234
          %s237 = sshll.u32 %s226, 4
          %s238 = int_to_ptr.vmem [resolvable:$true] %s237
          %s239 = sshll.u32 %s235, 4
          %s240 = int_to_ptr.hbm [resolvable:$true] %s239
          %242 = dma.vmem_to_hbm [thread:$0]  %s238, 64, %s240, %s223
        $region40: #{tpu_custom_call.1} parent=31 // pred_fallthru
          _
      $region32: #{tpu_custom_call.1} parent=5 // pred_fallthru
        _
      %p243 = scmp.le.s32.totalorder 2, %s15
      // Predicated region
      $region41: #{tpu_custom_call.1} parent=5 // pred_check
        %p244 = pneg %p243
      $region42: #{tpu_custom_call.1} parent=5 // pred_check_branch
        %246 = sbr.rel (%p244) target = $region44
      $region43: #{tpu_custom_call.1} parent=5 // pred_region
        %s247 = ssub.s32 %s15, 2
        // Predicated region
        $region45: #{tpu_custom_call.1} parent=43 // pred_check
          %p248 = pneg %p128
        $region46: #{tpu_custom_call.1} parent=43 // pred_check_branch
          %250 = sbr.rel (%p248) target = $region48
        $region47: #{tpu_custom_call.1} parent=43 // pred_region
          %s251 = sand.u32 %s113, 1
          %s252 = scalar_lea.sflag [#allocation4], %s251
          %s253 = sand.u32 %s113, 1
          %s254 = smul.addr %s253, 4
          %s255 = scalar_lea.vmem [#allocation5], %s254
          %257 = dma.done %s252, 64
        $region48: #{tpu_custom_call.1} parent=43 // pred_fallthru
          _
      $region44: #{tpu_custom_call.1} parent=5 // pred_fallthru
        _
    $region6: #{tpu_custom_call.1} parent=1 // loop_footer
      %s19 = sadd.s32 1, %s15
    $region7: #{tpu_custom_call.1} parent=1 // loop_footer_branch
      %14 = sbr.rel target = $region3
    $region8: #{tpu_custom_call.1} parent=1 // loop_exit
      _
    %258 = vsyncpa [#allocation3], 1
    %s259 = scalar_lea.sflag [#allocation3], 1
    %260 = vsyncpa %s259, 1
    %261 = vsyncpa [#allocation4], 1
    %s262 = scalar_lea.sflag [#allocation4], 1
    %263 = vsyncpa %s262, 1

</llo_original>
